<compile_context>
chip_gen: v7x
topology: tpu7x:2x2x1
jax: 0.10.0
libtpu: 0.0.40
codegen_flags: <defaults>
</compile_context>

<pallas_src>
import jax
import jax.numpy as jnp
from jax import lax
from jax.experimental import pallas as pl
from jax.experimental.pallas import tpu as pltpu


def _model_kernel(x_ref, z_ref, w1t_ref, b1_ref, w2t_ref, b2_ref, out_ref):
    x = x_ref[...]      # (1, 20)
    z = z_ref[0]        # (8, 20)   -- size-1 batch dim squeezed in-kernel
    w1t = w1t_ref[...]  # (20, 10)  pre-transposed weight (in, out)
    b1 = b1_ref[...]    # (1, 10)
    w2t = w2t_ref[...]  # (20, 10)
    b2 = b2_ref[...]    # (1, 10)

    # e_c = l1(x) : (1, 10)
    e_c = jnp.dot(x, w1t, preferred_element_type=jnp.float32) + b1
    # e_z = l2(z) : (8, 10)
    e_z = jnp.dot(z, w2t, preferred_element_type=jnp.float32) + b2
    # sim[b, s] = sum_h e_c[b, h] * e_z[s, h]  ->  (1, 8), native output layout
    sim = lax.dot_general(
        e_c, e_z,
        dimension_numbers=(((1,), (1,)), ((), ())),
        preferred_element_type=jnp.float32,
    )
    out_ref[...] = sim


def model_forward(x, z, w1t, b1, w2t, b2):
    """x: (1, 20), z: (1, 8, 20) -> sim: (1, 8).

    All operands are expected already in kernel layout (weights (in, out),
    biases (1, out)); no per-call preprocessing is done here.
    """
    B, S, D = z.shape
    assert B == 1 and x.shape == (1, D)
    vmem = pl.BlockSpec(memory_space=pltpu.MemorySpace.VMEM)
    return pl.pallas_call(
        _model_kernel,
        out_shape=jax.ShapeDtypeStruct((B, S), jnp.float32),
        in_specs=[vmem] * 6,
        out_specs=vmem,
    )(x, z, w1t, b1, w2t, b2)


def init_params(key, in_features=20, out_features=10):
    """Deterministic init mimicking torch.nn.Linear (uniform +/- 1/sqrt(fan_in)).

    Weights are produced directly in the kernel's (in, out) layout and biases
    as (1, out), so there is zero per-call preprocessing.
    """
    k1, k2, k3, k4 = jax.random.split(key, 4)
    bound = 1.0 / jnp.sqrt(in_features)
    w1t = jax.random.uniform(k1, (in_features, out_features), jnp.float32, -bound, bound)
    b1 = jax.random.uniform(k2, (1, out_features), jnp.float32, -bound, bound)
    w2t = jax.random.uniform(k3, (in_features, out_features), jnp.float32, -bound, bound)
    b2 = jax.random.uniform(k4, (1, out_features), jnp.float32, -bound, bound)
    return w1t, b1, w2t, b2


if __name__ == "__main__":
    key = jax.random.PRNGKey(0)
    kx, kz, kp = jax.random.split(key, 3)

    x = jax.random.uniform(kx, (1, 20), jnp.float32)      # matches torch.rand((1, 20))
    z = jax.random.uniform(kz, (1, 8, 20), jnp.float32)   # matches torch.rand((1, 8, 20))
    w1t, b1, w2t, b2 = init_params(kp)

    sim = model_forward(x, z, w1t, b1, w2t, b2)
    sim = jax.block_until_ready(sim)

    # Reference check in plain JAX (same math as the PyTorch module)
    e_c_ref = x @ w1t + b1                                  # (1, 10)
    e_z_ref = z @ w2t + b2                                  # (1, 8, 10)
    sim_ref = jnp.squeeze(jnp.matmul(e_z_ref, e_c_ref.T), -1)  # (1, 8)
    assert sim.shape == (1, 8)
    assert jnp.allclose(sim, sim_ref, atol=1e-5, rtol=1e-5)

    print("KERNEL_OK")
</pallas_src>

<mosaic_0001>
module attributes {stable_mosaic.version = 11 : i64} {
  func.func @_model_kernel(%arg0: memref<1x20xf32, #tpu.memory_space<vmem>>, %arg1: memref<1x8x20xf32, #tpu.memory_space<vmem>>, %arg2: memref<20x10xf32, #tpu.memory_space<vmem>>, %arg3: memref<1x10xf32, #tpu.memory_space<vmem>>, %arg4: memref<20x10xf32, #tpu.memory_space<vmem>>, %arg5: memref<1x10xf32, #tpu.memory_space<vmem>>, %arg6: memref<1x8xf32, #tpu.memory_space<vmem>>) attributes {dimension_semantics = [], scalar_prefetch = 0 : i64, scratch_operands = 0 : i64, tpu.core_type = #tpu.core_type<tc>} {
    %c0 = arith.constant 0 : index
    %c0_0 = arith.constant 0 : index
    %0 = vector.load %arg0[%c0, %c0_0] : memref<1x20xf32, #tpu.memory_space<vmem>>, vector<1x20xf32>
    %c0_1 = arith.constant 0 : index
    %c0_2 = arith.constant 0 : index
    %c0_3 = arith.constant 0 : index
    %1 = vector.load %arg1[%c0_1, %c0_2, %c0_3] : memref<1x8x20xf32, #tpu.memory_space<vmem>>, vector<1x8x20xf32>
    %2 = vector.shape_cast %1 : vector<1x8x20xf32> to vector<8x20xf32>
    %c0_4 = arith.constant 0 : index
    %c0_5 = arith.constant 0 : index
    %3 = vector.load %arg2[%c0_4, %c0_5] : memref<20x10xf32, #tpu.memory_space<vmem>>, vector<20x10xf32>
    %c0_6 = arith.constant 0 : index
    %c0_7 = arith.constant 0 : index
    %4 = vector.load %arg3[%c0_6, %c0_7] : memref<1x10xf32, #tpu.memory_space<vmem>>, vector<1x10xf32>
    %c0_8 = arith.constant 0 : index
    %c0_9 = arith.constant 0 : index
    %5 = vector.load %arg4[%c0_8, %c0_9] : memref<20x10xf32, #tpu.memory_space<vmem>>, vector<20x10xf32>
    %c0_10 = arith.constant 0 : index
    %c0_11 = arith.constant 0 : index
    %6 = vector.load %arg5[%c0_10, %c0_11] : memref<1x10xf32, #tpu.memory_space<vmem>>, vector<1x10xf32>
    %cst = arith.constant dense<0.000000e+00> : vector<1x10xf32>
    %7 = tpu.matmul %0, %3, %cst {dimension_numbers = #tpu.dot_dimension_numbers<[1], [0], [0], [1], [0, 0, 1, 1], [], []>} : vector<1x20xf32>, vector<20x10xf32>, vector<1x10xf32> -> vector<1x10xf32>
    %8 = arith.addf %7, %4 : vector<1x10xf32>
    %cst_12 = arith.constant dense<0.000000e+00> : vector<8x10xf32>
    %9 = tpu.matmul %2, %5, %cst_12 {dimension_numbers = #tpu.dot_dimension_numbers<[1], [0], [0], [1], [0, 0, 1, 1], [], []>} : vector<8x20xf32>, vector<20x10xf32>, vector<8x10xf32> -> vector<8x10xf32>
    %10 = vector.broadcast %6 : vector<1x10xf32> to vector<8x10xf32>
    %11 = arith.addf %9, %10 : vector<8x10xf32>
    %cst_13 = arith.constant dense<0.000000e+00> : vector<1x8xf32>
    %12 = tpu.matmul %8, %11, %cst_13 {dimension_numbers = #tpu.dot_dimension_numbers<[1], [1], [0], [0], [0, 0, 1, 0], [], []>} : vector<1x10xf32>, vector<8x10xf32>, vector<1x8xf32> -> vector<1x8xf32>
    %c0_14 = arith.constant 0 : index
    %c0_15 = arith.constant 0 : index
    %13 = vector.load %arg6[%c0_14, %c0_15] : memref<1x8xf32, #tpu.memory_space<vmem>>, vector<1x8xf32>
    tpu.vector_store %arg6[%c0_14, %c0_15], %12 {strides = array<i32>} : memref<1x8xf32, #tpu.memory_space<vmem>>, vector<1x8xf32>,
    return
  }
}

</mosaic_0001>

<llo_original>
// kernel: tpu_custom_call.1
$region0: #{tpu_custom_call.1}
  #allocation0 [shape = 'u32[]', space=smem, size = 0x4, offset = 0x4, fixed_abs, tag = 'smem constant byte address 0x4 - core index']
  #allocation1 [shape = 'u32[144,128]{1,0:T(1,128)}', space=vmem, size = 0x12000, scoped, tag = 'internal scratch']
  %s0 = inlined_call_operand.vmem [shape: f32[1,20], index: 0, kind: input, shape index: {}]
  %s1 = inlined_call_operand.vmem [shape: f32[1,8,20], index: 1, kind: input, shape index: {}]
  %s2 = inlined_call_operand.vmem [shape: f32[20,10], index: 2, kind: input, shape index: {}]
  %s3 = inlined_call_operand.vmem [shape: f32[1,10], index: 3, kind: input, shape index: {}]
  %s4 = inlined_call_operand.vmem [shape: f32[20,10], index: 4, kind: input, shape index: {}]
  %s5 = inlined_call_operand.vmem [shape: f32[1,10], index: 5, kind: input, shape index: {}]
  %s6 = inlined_call_operand.hbm [shape: f32[1,8], index: 6, kind: output, shape index: {}]
  %s7 = sld [smem:[#allocation0]]
  $region34: #{tpu_custom_call.1} parent=0
    _
  %s9 = ssub.s32 1, %s7
  %s10 = scalar_select 0, %s9, %s7
  $region1: #{tpu_custom_call.1} parent=0
    #allocation2 [shape = 'u8[512]{0}', space=vmem, size = 0x400, scoped, tag = 'output window, operand 0, single buffered']
    #allocation3 [shape = 's32[1]{0}', space=sflag, size = 0x4, scoped, tag = 'scoped memory for tpu_custom_call.1']
    %11 = vsyncpa [#allocation3], 0
    // Predicated region
    $region2: #{tpu_custom_call.1} parent=1 // pred_check
      _
    $region3: #{tpu_custom_call.1} parent=1 // pred_check_branch
      %13 = sbr.rel (0) target = $region5
    $region4: #{tpu_custom_call.1} parent=1 // pred_region
      _
    $region5: #{tpu_custom_call.1} parent=1 // pred_fallthru
      _
    // Predicated region
    $region6: #{tpu_custom_call.1} parent=1 // pred_check
      _
    $region7: #{tpu_custom_call.1} parent=1 // pred_check_branch
      %15 = sbr.rel (0) target = $region9
    $region8: #{tpu_custom_call.1} parent=1 // pred_region
      _
    $region9: #{tpu_custom_call.1} parent=1 // pred_fallthru
      _
    // Predicated region
    $region10: #{tpu_custom_call.1} parent=1 // pred_check
      _
    $region11: #{tpu_custom_call.1} parent=1 // pred_check_branch
      %17 = sbr.rel (0) target = $region13
    $region12: #{tpu_custom_call.1} parent=1 // pred_region
      _
    $region13: #{tpu_custom_call.1} parent=1 // pred_fallthru
      _
    // Predicated region
    $region14: #{tpu_custom_call.1} parent=1 // pred_check
      _
    $region15: #{tpu_custom_call.1} parent=1 // pred_check_branch
      %19 = sbr.rel (0) target = $region17
    $region16: #{tpu_custom_call.1} parent=1 // pred_region
      _
    $region17: #{tpu_custom_call.1} parent=1 // pred_fallthru
      _
    // Predicated region
    $region18: #{tpu_custom_call.1} parent=1 // pred_check
      _
    $region19: #{tpu_custom_call.1} parent=1 // pred_check_branch
      %21 = sbr.rel (0) target = $region21
    $region20: #{tpu_custom_call.1} parent=1 // pred_region
      _
    $region21: #{tpu_custom_call.1} parent=1 // pred_fallthru
      _
    // Predicated region
    $region22: #{tpu_custom_call.1} parent=1 // pred_check
      _
    $region23: #{tpu_custom_call.1} parent=1 // pred_check_branch
      %23 = sbr.rel (0) target = $region25
    $region24: #{tpu_custom_call.1} parent=1 // pred_region
      _
    $region25: #{tpu_custom_call.1} parent=1 // pred_fallthru
      _
    %v24 = vld [vmem:[%s0] sm:$0x1]
    %v25 = vld [vmem:[%s1] sm:$0xff]
    %v26 = vld [vmem:[%s2] sm:$0xff]
    %v27 = vld [vmem:[%s2 + $0x8] sm:$0xff]
    %v28 = vld [vmem:[%s2 + $0x10] sm:$0xf]
    %v29 = vld [vmem:[%s3] sm:$0x1]
    %v30 = vld [vmem:[%s4] sm:$0xff]
    %v31 = vld [vmem:[%s4 + $0x8] sm:$0xff]
    %v32 = vld [vmem:[%s4 + $0x10] sm:$0xf]
    %v33 = vld [vmem:[%s5] sm:$0x1]
    %vm34 = vcmask 162816
    %v36 = vsel %vm34, %v24, 0
    %vm38 = vcmask 1043456
    %v40 = vsel %vm38, %v28, 0
    %42 = vmatprep.subr.mxu0 0.0
    %43 = vmatpush1.msra.mxu0 %v26
    %44 = vmatprep.subr.mxu0 0.0
    %45 = vmatpush1.msra.mxu0 %v27
    %46 = vmatprep.subr.mxu0 0.0
    %47 = vmatpush1.msra.mxu0 %v40
    %48 = vmatprep.subr.mxu0 0.0
    %49 = vmatpush1.msra.mxu0 0.0
    %50 = vmatprep.subr.mxu0 0.0
    %51 = vmatpush1.msra.mxu0 0.0
    %52 = vmatprep.subr.mxu0 0.0
    %53 = vmatpush1.msra.mxu0 0.0
    %54 = vmatprep.subr.mxu0 0.0
    %55 = vmatpush1.msra.mxu0 0.0
    %56 = vmatprep.subr.mxu0 0.0
    %57 = vmatpush1.msra.mxu0 0.0
    %58 = vmatprep.subr.mxu0 0.0
    %59 = vmatpush1.msra.mxu0 0.0
    %60 = vmatprep.subr.mxu0 0.0
    %61 = vmatpush1.msra.mxu0 0.0
    %62 = vmatprep.subr.mxu0 0.0
    %63 = vmatpush1.msra.mxu0 0.0
    %64 = vmatprep.subr.mxu0 0.0
    %65 = vmatpush1.msra.mxu0 0.0
    %66 = vmatprep.subr.mxu0 0.0
    %67 = vmatpush1.msra.mxu0 0.0
    %68 = vmatprep.subr.mxu0 0.0
    %69 = vmatpush1.msra.mxu0 0.0
    %70 = vmatprep.subr.mxu0 0.0
    %71 = vmatpush1.msra.mxu0 0.0
    %72 = vmatprep.subr.mxu0 0.0
    %73 = vmatpush1.msra.mxu0 0.0
    %74 = vmatprep.subr.mxu0 0.0
    %75 = vmatpush1.msra.mxu0 0.0
    %76 = vmatprep.subr.mxu0 0.0
    %77 = vmatpush1.msra.mxu0 0.0
    %78 = vmatprep.subr.mxu0 0.0
    %79 = vmatpush1.msra.mxu0 0.0
    %80 = vmatprep.subr.mxu0 0.0
    %81 = vmatpush1.msra.mxu0 0.0
    %82 = vmatprep.subr.mxu0 0.0
    %83 = vmatpush1.msra.mxu0 0.0
    %84 = vmatprep.subr.mxu0 0.0
    %85 = vmatpush1.msra.mxu0 0.0
    %86 = vmatprep.subr.mxu0 0.0
    %87 = vmatpush1.msra.mxu0 0.0
    %88 = vmatprep.subr.mxu0 0.0
    %89 = vmatpush1.msra.mxu0 0.0
    %90 = vmatprep.subr.mxu0 0.0
    %91 = vmatpush1.msra.mxu0 0.0
    %92 = vmatprep.subr.mxu0 0.0
    %93 = vmatpush1.msra.mxu0 0.0
    %94 = vmatprep.subr.mxu0 0.0
    %95 = vmatpush1.msra.mxu0 0.0
    %96 = vmatprep.subr.mxu0 0.0
    %97 = vmatpush1.msra.mxu0 0.0
    %98 = vmatprep.subr.mxu0 0.0
    %99 = vmatpush1.msra.mxu0 0.0
    %100 = vmatprep.subr.mxu0 0.0
    %101 = vmatpush1.msra.mxu0 0.0
    %102 = vmatprep.subr.mxu0 0.0
    %103 = vmatpush1.msra.mxu0 0.0
    %104 = vmatprep.subr.mxu0 0.0
    %105 = vmatpush1.msra.mxu0 0.0
    %106 = vmatprep.mubr.f32.mxu0 0.0
    %107 = vmatmul.mubr.f32.gmra.mrb[0].mxu0 %v36
    %v108 = vpop.f32.mrb[0].mxu0
    %v109 = vadd.f32 %v29, %v108
    %v110 = vpop.f32.mrb[0].mxu0
    %111 = vdwg.mxu0
    %v113 = vlaneseq
    %v114 = vshrl.u32 %v113, 7
    %v115 = vsub.s32 0, %v114
    %v116 = vrot.slane %v33, %v115
    %v119 = vsel %vm34, %v25, 0
    %v122 = vsel %vm38, %v32, 0
    %124 = vmatprep.subr.mxu0 0.0
    %125 = vmatpush1.msra.mxu0 %v30
    %126 = vmatprep.subr.mxu0 0.0
    %127 = vmatpush1.msra.mxu0 %v31
    %128 = vmatprep.subr.mxu0 0.0
    %129 = vmatpush1.msra.mxu0 %v122
    %130 = vmatprep.subr.mxu0 0.0
    %131 = vmatpush1.msra.mxu0 0.0
    %132 = vmatprep.subr.mxu0 0.0
    %133 = vmatpush1.msra.mxu0 0.0
    %134 = vmatprep.subr.mxu0 0.0
    %135 = vmatpush1.msra.mxu0 0.0
    %136 = vmatprep.subr.mxu0 0.0
    %137 = vmatpush1.msra.mxu0 0.0
    %138 = vmatprep.subr.mxu0 0.0
    %139 = vmatpush1.msra.mxu0 0.0
    %140 = vmatprep.subr.mxu0 0.0
    %141 = vmatpush1.msra.mxu0 0.0
    %142 = vmatprep.subr.mxu0 0.0
    %143 = vmatpush1.msra.mxu0 0.0
    %144 = vmatprep.subr.mxu0 0.0
    %145 = vmatpush1.msra.mxu0 0.0
    %146 = vmatprep.subr.mxu0 0.0
    %147 = vmatpush1.msra.mxu0 0.0
    %148 = vmatprep.subr.mxu0 0.0
    %149 = vmatpush1.msra.mxu0 0.0
    %150 = vmatprep.subr.mxu0 0.0
    %151 = vmatpush1.msra.mxu0 0.0
    %152 = vmatprep.subr.mxu0 0.0
    %153 = vmatpush1.msra.mxu0 0.0
    %154 = vmatprep.subr.mxu0 0.0
    %155 = vmatpush1.msra.mxu0 0.0
    %156 = vmatprep.subr.mxu0 0.0
    %157 = vmatpush1.msra.mxu0 0.0
    %158 = vmatprep.subr.mxu0 0.0
    %159 = vmatpush1.msra.mxu0 0.0
    %160 = vmatprep.subr.mxu0 0.0
    %161 = vmatpush1.msra.mxu0 0.0
    %162 = vmatprep.subr.mxu0 0.0
    %163 = vmatpush1.msra.mxu0 0.0
    %164 = vmatprep.subr.mxu0 0.0
    %165 = vmatpush1.msra.mxu0 0.0
    %166 = vmatprep.subr.mxu0 0.0
    %167 = vmatpush1.msra.mxu0 0.0
    %168 = vmatprep.subr.mxu0 0.0
    %169 = vmatpush1.msra.mxu0 0.0
    %170 = vmatprep.subr.mxu0 0.0
    %171 = vmatpush1.msra.mxu0 0.0
    %172 = vmatprep.subr.mxu0 0.0
    %173 = vmatpush1.msra.mxu0 0.0
    %174 = vmatprep.subr.mxu0 0.0
    %175 = vmatpush1.msra.mxu0 0.0
    %176 = vmatprep.subr.mxu0 0.0
    %177 = vmatpush1.msra.mxu0 0.0
    %178 = vmatprep.subr.mxu0 0.0
    %179 = vmatpush1.msra.mxu0 0.0
    %180 = vmatprep.subr.mxu0 0.0
    %181 = vmatpush1.msra.mxu0 0.0
    %182 = vmatprep.subr.mxu0 0.0
    %183 = vmatpush1.msra.mxu0 0.0
    %184 = vmatprep.subr.mxu0 0.0
    %185 = vmatpush1.msra.mxu0 0.0
    %186 = vmatprep.subr.mxu0 0.0
    %187 = vmatpush1.msra.mxu0 0.0
    %188 = vmatprep.mubr.f32.mxu0 0.0
    %189 = vmatmul.mubr.f32.gmra.mrb[0].mxu0 %v119
    %v190 = vpop.f32.mrb[0].mxu0
    %v191 = vadd.f32 %v116, %v190
    %v192 = vpop.f32.mrb[0].mxu0
    %193 = vdwg.mxu0
    %vm194 = vcmask 80896
    %v196 = vsel %vm194, %v109, 0
    %v199 = vsel %vm194, %v191, 0
    %201 = vmatprep.subr.mxu0 0.0
    %202 = vmatpush1.xpose.msra.mxu0 %v199
    %203 = vmatprep.subr.mxu0 0.0
    %204 = vmatpush1.xpose.msra.mxu0 0.0
    %205 = vmatprep.subr.mxu0 0.0
    %206 = vmatpush1.xpose.msra.mxu0 0.0
    %207 = vmatprep.subr.mxu0 0.0
    %208 = vmatpush1.xpose.msra.mxu0 0.0
    %209 = vmatprep.subr.mxu0 0.0
    %210 = vmatpush1.xpose.msra.mxu0 0.0
    %211 = vmatprep.subr.mxu0 0.0
    %212 = vmatpush1.xpose.msra.mxu0 0.0
    %213 = vmatprep.subr.mxu0 0.0
    %214 = vmatpush1.xpose.msra.mxu0 0.0
    %215 = vmatprep.subr.mxu0 0.0
    %216 = vmatpush1.xpose.msra.mxu0 0.0
    %217 = vmatprep.subr.mxu0 0.0
    %218 = vmatpush1.xpose.msra.mxu0 0.0
    %219 = vmatprep.subr.mxu0 0.0
    %220 = vmatpush1.xpose.msra.mxu0 0.0
    %221 = vmatprep.subr.mxu0 0.0
    %222 = vmatpush1.xpose.msra.mxu0 0.0
    %223 = vmatprep.subr.mxu0 0.0
    %224 = vmatpush1.xpose.msra.mxu0 0.0
    %225 = vmatprep.subr.mxu0 0.0
    %226 = vmatpush1.xpose.msra.mxu0 0.0
    %227 = vmatprep.subr.mxu0 0.0
    %228 = vmatpush1.xpose.msra.mxu0 0.0
    %229 = vmatprep.subr.mxu0 0.0
    %230 = vmatpush1.xpose.msra.mxu0 0.0
    %231 = vmatprep.subr.mxu0 0.0
    %232 = vmatpush1.xpose.msra.mxu0 0.0
    %233 = vmatprep.subr.mxu0 0.0
    %234 = vmatpush1.xpose.msra.mxu0 0.0
    %235 = vmatprep.subr.mxu0 0.0
    %236 = vmatpush1.xpose.msra.mxu0 0.0
    %237 = vmatprep.subr.mxu0 0.0
    %238 = vmatpush1.xpose.msra.mxu0 0.0
    %239 = vmatprep.subr.mxu0 0.0
    %240 = vmatpush1.xpose.msra.mxu0 0.0
    %241 = vmatprep.subr.mxu0 0.0
    %242 = vmatpush1.xpose.msra.mxu0 0.0
    %243 = vmatprep.subr.mxu0 0.0
    %244 = vmatpush1.xpose.msra.mxu0 0.0
    %245 = vmatprep.subr.mxu0 0.0
    %246 = vmatpush1.xpose.msra.mxu0 0.0
    %247 = vmatprep.subr.mxu0 0.0
    %248 = vmatpush1.xpose.msra.mxu0 0.0
    %249 = vmatprep.subr.mxu0 0.0
    %250 = vmatpush1.xpose.msra.mxu0 0.0
    %251 = vmatprep.subr.mxu0 0.0
    %252 = vmatpush1.xpose.msra.mxu0 0.0
    %253 = vmatprep.subr.mxu0 0.0
    %254 = vmatpush1.xpose.msra.mxu0 0.0
    %255 = vmatprep.subr.mxu0 0.0
    %256 = vmatpush1.xpose.msra.mxu0 0.0
    %257 = vmatprep.subr.mxu0 0.0
    %258 = vmatpush1.xpose.msra.mxu0 0.0
    %259 = vmatprep.subr.mxu0 0.0
    %260 = vmatpush1.xpose.msra.mxu0 0.0
    %261 = vmatprep.subr.mxu0 0.0
    %262 = vmatpush1.xpose.msra.mxu0 0.0
    %263 = vmatprep.subr.mxu0 0.0
    %264 = vmatpush1.xpose.msra.mxu0 0.0
    %265 = vmatprep.mubr.f32.mxu0 0.0
    %266 = vmatmul.mubr.f32.gmra.mrb[0].mxu0 %v196
    %v267 = vpop.f32.mrb[0].mxu0
    %v268 = vadd.f32 0.0, %v267
    %v269 = vpop.f32.mrb[0].mxu0
    %270 = vdwg.mxu0
    %vm271 = vcmask 57344
    %272 = vst.msk [vmem:[#allocation2] sm:$0x1] %vm271, %v268
    // Predicated region
    $region26: #{tpu_custom_call.1} parent=1 // pred_check
      _
    $region27: #{tpu_custom_call.1} parent=1 // pred_check_branch
      %274 = sbr.rel (0) target = $region29
    $region28: #{tpu_custom_call.1} parent=1 // pred_region
      %s276 = ssub.s32 16, 16
      %277 = vsyncadd [#allocation3], %s276
      %s279 = sshll.u32 [#allocation2], 4
      %s280 = int_to_ptr.vmem [resolvable:$true] %s279
      %282 = dma.vmem_to_hbm [thread:$0]  %s280, 16, %s6, [#allocation3]
    $region29: #{tpu_custom_call.1} parent=1 // pred_fallthru
      _
    // Predicated region
    $region30: #{tpu_custom_call.1} parent=1 // pred_check
      _
    $region31: #{tpu_custom_call.1} parent=1 // pred_check_branch
      %284 = sbr.rel (0) target = $region33
    $region32: #{tpu_custom_call.1} parent=1 // pred_region
      %285 = dma.done [#allocation3], 16
    $region33: #{tpu_custom_call.1} parent=1 // pred_fallthru
      _
    %286 = vsyncpa [#allocation3], 1

</llo_original>
